<compile_context>
chip_gen: v7x
topology: tpu7x:2x2x1
jax: 0.10.0
libtpu: 0.0.40
codegen_flags: <defaults>
</compile_context>

<pallas_src>
import functools

import jax
import jax.numpy as jnp
from jax import lax
from jax.experimental import pallas as pl
from jax.experimental.pallas import tpu as pltpu


def lane_encoder_kernel(x_ref, w_ref, b_ref, g_ref, beta_ref,
                        feat_ref, pool_ref, *, bt, n, hidden, hidden_p):
    """One grid step: bt batch elements (= bt*n waypoint rows).

    x_ref:    (bt*n, D)   waypoints, rows grouped by batch element
    w_ref:    (D, Hp)     Linear weight (lane-padded to Hp if requested)
    b_ref:    (1, Hp)     Linear bias          (f32, zero in pad lanes)
    g_ref:    (1, Hp)     LayerNorm gamma      (f32, zero in pad lanes)
    beta_ref: (1, Hp)     LayerNorm beta       (f32, zero in pad lanes)
    feat_ref: (bt*n, Hp)  ReLU(LN(Wx+b)) per waypoint
    pool_ref: (bt, Hp)    max over the n waypoints of each batch element
    """
    # ---- Linear (MXU), f32 accumulation ----
    # TODO(synk): if profiling shows the (rows, D=4) operand's MXU push/relayout
    # on the critical path, replace with D unrolled VPU broadcast-FMAs.
    h = jnp.dot(x_ref[...], w_ref[...], preferred_element_type=jnp.float32)
    h = h + b_ref[...]                                        # [rows, Hp]

    # ---- LayerNorm over the true H columns (biased var, eps=1e-5), f32 ----
    # Pad columns of h are exactly 0 (zero weight columns / zero bias), so the
    # sums over Hp only need a scalar correction for the variance.
    inv_h = 1.0 / hidden
    mean = jnp.sum(h, axis=-1, keepdims=True) * inv_h
    cen = h - mean
    ssq = jnp.sum(cen * cen, axis=-1, keepdims=True)
    if hidden_p != hidden:                       # pad columns contribute (-mean)^2
        ssq = ssq - (hidden_p - hidden) * (mean * mean)
    h = cen * lax.rsqrt(ssq * inv_h + 1e-5)
    h = h * g_ref[...] + beta_ref[...]           # pad lanes -> 0 (gamma=beta=0)

    # ---- ReLU ----
    h = jnp.maximum(h, 0.0)                                   # [rows, Hp]

    # ---- per-batch max over the sequence; rows are grouped [bt, n] and
    #      n % 8 == 0, so this reshape is a pure view (no relayout copy) ----
    m = jnp.max(h.reshape(bt, n, hidden_p), axis=1)           # [bt, Hp]

    feat_ref[...] = h.astype(feat_ref.dtype)
    pool_ref[...] = m.astype(pool_ref.dtype)


def _pick_block_batch(B, n, per_batch_bytes, *, target_rows=1024,
                      min_grid_steps=2, vmem_budget=40 << 20):
    """Choose how many batch elements (bt) each grid step processes.

    (1) aim for ~target_rows rows per step (amortizes ~0.35us/step overhead
        and the grid-invariant weight/bias DMAs),
    (2) cap the double-buffered block footprint well below v7x's 64 MiB VMEM,
    (3) prefer >= min_grid_steps grid steps (pipelining; pass min_grid_steps=4
        on v7x so both TensorCores get an even share) unless that would shrink
        blocks below ~128 rows.
    """
    bt = max(1, min(B, target_rows // max(n, 1)))
    bt = max(1, min(bt, vmem_budget // max(1, 2 * per_batch_bytes)))
    steps = -(-B // bt)
    if steps < min_grid_steps:
        bt_split = -(-B // min_grid_steps)
        if bt_split >= 1 and bt_split * n >= 128:
            bt = bt_split
    return bt


def lane_encoder_split(waypoints, w, b, gamma, beta, *,
                       block_batch=None, target_rows=1024, min_grid_steps=2,
                       input_dtype=None, out_dtype=jnp.float32,
                       pad_hidden_to=None):
    """Core kernel wrapper.  Returns (features [B, n, H], pooled max [B, H])."""
    B, n, D = waypoints.shape
    D_w, H = w.shape
    assert D_w == D, (D_w, D)

    # --- sequence padding so rows (= bt * n_pad) stays sublane (8) aligned ---
    n_pad = -(-n // 8) * 8
    if n_pad != n:
        # Duplicate the last real waypoint (max-pool invariant); NOT zeros.
        waypoints = jnp.pad(waypoints, ((0, 0), (0, n_pad - n), (0, 0)),
                            mode="edge")

    # --- optional lane padding of the hidden dim ---
    Hp = H if pad_hidden_to is None else (-(-H // pad_hidden_to) * pad_hidden_to)
    if Hp != H:
        w = jnp.pad(w, ((0, 0), (0, Hp - H)))
        b = jnp.pad(b, (0, Hp - H))
        gamma = jnp.pad(gamma, (0, Hp - H))
        beta = jnp.pad(beta, (0, Hp - H))

    in_dt = jnp.dtype(input_dtype) if input_dtype is not None else jnp.dtype(waypoints.dtype)
    out_dt = jnp.dtype(out_dtype)

    # --- block size (bt batch elements per grid step) ---
    per_batch_bytes = (n_pad * (D * in_dt.itemsize + Hp * out_dt.itemsize)
                       + Hp * out_dt.itemsize)
    if block_batch is not None:
        bt = int(block_batch)
    else:
        bt = _pick_block_batch(B, n_pad, per_batch_bytes,
                               target_rows=target_rows,
                               min_grid_steps=min_grid_steps)
    steps = -(-B // bt)
    B_pad = steps * bt
    if B_pad != B:
        # Whole padded batch elements form their own pools and are sliced off,
        # so zero padding is safe here (unlike padding along n).
        waypoints = jnp.pad(waypoints, ((0, B_pad - B), (0, 0), (0, 0)))

    rows = bt * n_pad

    # Row-major flatten is a free metadata reshape.
    x = waypoints.reshape(B_pad * n_pad, D)
    if input_dtype is not None:
        x = x.astype(input_dtype)
        w = w.astype(input_dtype)
    b2 = b.reshape(1, Hp).astype(jnp.float32)
    g2 = gamma.reshape(1, Hp).astype(jnp.float32)
    be2 = beta.reshape(1, Hp).astype(jnp.float32)

    kernel = functools.partial(lane_encoder_kernel, bt=bt, n=n_pad,
                               hidden=H, hidden_p=Hp)

    # VMEM limit from the actual double-buffered block footprint (+ headroom),
    # clamped to stay within v7x's 64 MiB physical VMEM.
    blk_bytes = (rows * D * jnp.dtype(x.dtype).itemsize
                 + rows * Hp * out_dt.itemsize
                 + bt * Hp * out_dt.itemsize)
    par_bytes = D * Hp * jnp.dtype(w.dtype).itemsize + 3 * Hp * 4
    vmem_limit = int(min(max(2 * (blk_bytes + par_bytes) + (4 << 20), 32 << 20),
                         64 << 20))

    feats, pooled = pl.pallas_call(
        kernel,
        out_shape=(jax.ShapeDtypeStruct((B_pad * n_pad, Hp), out_dt),
                   jax.ShapeDtypeStruct((steps, bt, Hp), out_dt)),
        grid_spec=pltpu.PrefetchScalarGridSpec(
            num_scalar_prefetch=0,
            grid=(steps,),
            in_specs=[
                pl.BlockSpec((rows, D), lambda i: (i, 0)),
                # Grid-invariant params: constant index_map -> fetched once.
                pl.BlockSpec((D, Hp), lambda i: (0, 0)),
                pl.BlockSpec((1, Hp), lambda i: (0, 0)),
                pl.BlockSpec((1, Hp), lambda i: (0, 0)),
                pl.BlockSpec((1, Hp), lambda i: (0, 0)),
            ],
            out_specs=[
                pl.BlockSpec((rows, Hp), lambda i: (i, 0)),
                # Leading dim squeezed; kernel sees a (bt, Hp) pooled block.
                pl.BlockSpec((None, bt, Hp), lambda i: (i, 0, 0)),
            ],
        ),
        compiler_params=pltpu.CompilerParams(
            dimension_semantics=("parallel",),
            vmem_limit_bytes=vmem_limit,
        ),
    )(x, w, b2, g2, be2)

    feats = feats.reshape(B_pad, n_pad, Hp)[:B, :n, :H]
    pooled = pooled.reshape(B_pad, Hp)[:B, :H]
    return feats, pooled


def lane_encoder(waypoints, w, b, gamma, beta, **kwargs):
    """Module-parity entry point.  waypoints [B, n, D] -> [B, n, 2H].

    The broadcast of the pooled max over n and the concat are left to XLA
    (they fuse into the consumer); the Pallas kernel only writes the
    non-redundant features [B*n, H] and pooled max [B, H].
    """
    feats, pooled = lane_encoder_split(waypoints, w, b, gamma, beta, **kwargs)
    B, n, H = feats.shape
    pooled_b = jnp.broadcast_to(pooled[:, None, :], (B, n, H))
    return jnp.concatenate([pooled_b, feats], axis=-1)


def lane_encoder_ref(waypoints, w, b, gamma, beta):
    # Pure-JAX reference mirroring the PyTorch module.
    h = jnp.einsum("bnd,dh->bnh", waypoints, w) + b[None, None, :]
    mean = jnp.mean(h, axis=-1, keepdims=True)
    var = jnp.mean((h - mean) ** 2, axis=-1, keepdims=True)
    h = (h - mean) / jnp.sqrt(var + 1e-5)
    h = h * gamma[None, None, :] + beta[None, None, :]
    h = jnp.maximum(h, 0.0)
    m = jnp.max(h, axis=1, keepdims=True)                     # [B, 1, H]
    m_b = jnp.broadcast_to(m, h.shape)                        # [B, n, H]
    return jnp.concatenate([m_b, h], axis=-1)                 # [B, n, 2H]


if __name__ == "__main__":
    # Small shapes consistent with the module: waypoints [B, n, waypoint_dim].
    B, n, D, H = 2, 8, 4, 32

    key = jax.random.PRNGKey(0)
    k_x, k_w, k_b = jax.random.split(key, 3)

    waypoints = jax.random.normal(k_x, (B, n, D), dtype=jnp.float32)

    # PyTorch Linear init: uniform(-1/sqrt(D), 1/sqrt(D)).
    bound = 1.0 / jnp.sqrt(jnp.float32(D))
    w = jax.random.uniform(k_w, (D, H), jnp.float32, -bound, bound)   # fc1.weight.T
    b = jax.random.uniform(k_b, (H,), jnp.float32, -bound, bound)     # fc1.bias
    gamma = jnp.ones((H,), jnp.float32)    # LayerNorm weight
    beta = jnp.zeros((H,), jnp.float32)    # LayerNorm bias

    ref = lane_encoder_ref(waypoints, w, b, gamma, beta)

    # 1) f32 path: module semantics.
    out = jax.block_until_ready(lane_encoder(waypoints, w, b, gamma, beta))
    assert out.shape == (B, n, 2 * H), out.shape
    assert jnp.allclose(out, ref, atol=1e-4, rtol=1e-4), "mismatch vs ref (f32)"

    # 2) bf16 input + bf16 output: halves input DMA and output writeback.
    out_bf16 = jax.block_until_ready(
        lane_encoder(waypoints, w, b, gamma, beta,
                     input_dtype=jnp.bfloat16, out_dtype=jnp.bfloat16))
    assert out_bf16.shape == (B, n, 2 * H), out_bf16.shape
    assert jnp.allclose(out_bf16.astype(jnp.float32), ref,
                        atol=5e-2, rtol=5e-2), "mismatch vs ref (bf16)"

    # 3) lane-padded hidden dim (H -> 128): unmasked full-lane stores.
    out_pad = jax.block_until_ready(
        lane_encoder(waypoints, w, b, gamma, beta, pad_hidden_to=128))
    assert out_pad.shape == (B, n, 2 * H), out_pad.shape
    assert jnp.allclose(out_pad, ref, atol=1e-4, rtol=1e-4), "mismatch (pad H)"

    # 4) odd sequence length / non-divisor block_batch: exercises the
    #    edge-duplication n-padding (7 -> 8) and batch zero-padding (3 -> 4).
    B2, n2 = 3, 7
    waypoints2 = jax.random.normal(jax.random.fold_in(k_x, 1), (B2, n2, D),
                                   dtype=jnp.float32)
    ref2 = lane_encoder_ref(waypoints2, w, b, gamma, beta)
    out2 = jax.block_until_ready(
        lane_encoder(waypoints2, w, b, gamma, beta, block_batch=2))
    assert out2.shape == (B2, n2, 2 * H), out2.shape
    assert jnp.allclose(out2, ref2, atol=1e-4, rtol=1e-4), "mismatch (padded)"

    print("KERNEL_OK")
</pallas_src>

<mosaic_0001>
module attributes {stable_mosaic.version = 11 : i64} {
  func.func @lane_encoder_kernel(%arg0: i32, %arg1: memref<16x4xf32, #tpu.memory_space<vmem>>, %arg2: memref<4x32xf32, #tpu.memory_space<vmem>>, %arg3: memref<1x32xf32, #tpu.memory_space<vmem>>, %arg4: memref<1x32xf32, #tpu.memory_space<vmem>>, %arg5: memref<1x32xf32, #tpu.memory_space<vmem>>, %arg6: memref<16x32xf32, #tpu.memory_space<vmem>>, %arg7: memref<1x2x32xf32, #tpu.memory_space<vmem>>) attributes {dimension_semantics = [#tpu.dimension_semantics<parallel>], iteration_bounds = array<i64: 1>, scalar_prefetch = 0 : i64, scratch_operands = 0 : i64, tpu.core_type = #tpu.core_type<tc>, window_params = [{transform_indices = @transform_0, window_bounds = array<i64: 16, 4>}, {pipeline_mode = #tpu.pipeline_mode<synchronous>, transform_indices = @transform_1, window_bounds = array<i64: 4, 32>}, {pipeline_mode = #tpu.pipeline_mode<synchronous>, transform_indices = @transform_2, window_bounds = array<i64: 1, 32>}, {pipeline_mode = #tpu.pipeline_mode<synchronous>, transform_indices = @transform_3, window_bounds = array<i64: 1, 32>}, {pipeline_mode = #tpu.pipeline_mode<synchronous>, transform_indices = @transform_4, window_bounds = array<i64: 1, 32>}, {transform_indices = @transform_5, window_bounds = array<i64: 16, 32>}, {transform_indices = @transform_6, window_bounds = array<i64: 1, 2, 32>}]} {
    %c0 = arith.constant 0 : index
    %c0_0 = arith.constant 0 : index
    %0 = vector.load %arg1[%c0, %c0_0] : memref<16x4xf32, #tpu.memory_space<vmem>>, vector<16x4xf32>
    %c0_1 = arith.constant 0 : index
    %c0_2 = arith.constant 0 : index
    %1 = vector.load %arg2[%c0_1, %c0_2] : memref<4x32xf32, #tpu.memory_space<vmem>>, vector<4x32xf32>
    %cst = arith.constant dense<0.000000e+00> : vector<16x32xf32>
    %2 = tpu.matmul %0, %1, %cst {dimension_numbers = #tpu.dot_dimension_numbers<[1], [0], [0], [1], [0, 0, 1, 1], [], []>} : vector<16x4xf32>, vector<4x32xf32>, vector<16x32xf32> -> vector<16x32xf32>
    %c0_3 = arith.constant 0 : index
    %c0_4 = arith.constant 0 : index
    %3 = vector.load %arg3[%c0_3, %c0_4] : memref<1x32xf32, #tpu.memory_space<vmem>>, vector<1x32xf32>
    %4 = vector.broadcast %3 : vector<1x32xf32> to vector<16x32xf32>
    %5 = arith.addf %2, %4 : vector<16x32xf32>
    %cst_5 = arith.constant dense<0.000000e+00> : vector<16xf32>
    %6 = vector.multi_reduction <add>, %5, %cst_5 [1] : vector<16x32xf32> to vector<16xf32>
    %7 = vector.shape_cast %6 : vector<16xf32> to vector<16x1xf32>
    %cst_6 = arith.constant 3.125000e-02 : f32
    %8 = vector.broadcast %cst_6 : f32 to vector<16x1xf32>
    %9 = arith.mulf %7, %8 : vector<16x1xf32>
    %10 = vector.broadcast %9 : vector<16x1xf32> to vector<16x32xf32>
    %11 = arith.subf %5, %10 : vector<16x32xf32>
    %12 = arith.mulf %11, %11 : vector<16x32xf32>
    %cst_7 = arith.constant dense<0.000000e+00> : vector<16xf32>
    %13 = vector.multi_reduction <add>, %12, %cst_7 [1] : vector<16x32xf32> to vector<16xf32>
    %14 = vector.shape_cast %13 : vector<16xf32> to vector<16x1xf32>
    %cst_8 = arith.constant 3.125000e-02 : f32
    %15 = vector.broadcast %cst_8 : f32 to vector<16x1xf32>
    %16 = arith.mulf %14, %15 : vector<16x1xf32>
    %cst_9 = arith.constant 9.99999974E-6 : f32
    %17 = vector.broadcast %cst_9 : f32 to vector<16x1xf32>
    %18 = arith.addf %16, %17 : vector<16x1xf32>
    %19 = math.rsqrt %18 : vector<16x1xf32>
    %20 = vector.broadcast %19 : vector<16x1xf32> to vector<16x32xf32>
    %21 = arith.mulf %11, %20 : vector<16x32xf32>
    %c0_10 = arith.constant 0 : index
    %c0_11 = arith.constant 0 : index
    %22 = vector.load %arg4[%c0_10, %c0_11] : memref<1x32xf32, #tpu.memory_space<vmem>>, vector<1x32xf32>
    %23 = vector.broadcast %22 : vector<1x32xf32> to vector<16x32xf32>
    %24 = arith.mulf %21, %23 : vector<16x32xf32>
    %c0_12 = arith.constant 0 : index
    %c0_13 = arith.constant 0 : index
    %25 = vector.load %arg5[%c0_12, %c0_13] : memref<1x32xf32, #tpu.memory_space<vmem>>, vector<1x32xf32>
    %26 = vector.broadcast %25 : vector<1x32xf32> to vector<16x32xf32>
    %27 = arith.addf %24, %26 : vector<16x32xf32>
    %cst_14 = arith.constant 0.000000e+00 : f32
    %28 = vector.broadcast %cst_14 : f32 to vector<16x32xf32>
    %29 = arith.maximumf %27, %28 : vector<16x32xf32>
    %30 = vector.shape_cast %29 : vector<16x32xf32> to vector<2x8x32xf32>
    %cst_15 = arith.constant dense<0xFF800000> : vector<2x32xf32>
    %31 = vector.multi_reduction <maximumf>, %30, %cst_15 [1] : vector<2x8x32xf32> to vector<2x32xf32>
    %c0_16 = arith.constant 0 : index
    %c0_17 = arith.constant 0 : index
    %32 = vector.load %arg6[%c0_16, %c0_17] : memref<16x32xf32, #tpu.memory_space<vmem>>, vector<16x32xf32>
    tpu.vector_store %arg6[%c0_16, %c0_17], %29 {strides = array<i32>} : memref<16x32xf32, #tpu.memory_space<vmem>>, vector<16x32xf32>,
    %c0_18 = arith.constant 0 : index
    %c0_19 = arith.constant 0 : index
    %c0_20 = arith.constant 0 : index
    %33 = vector.load %arg7[%c0_18, %c0_19, %c0_20] : memref<1x2x32xf32, #tpu.memory_space<vmem>>, vector<1x2x32xf32>
    %34 = vector.shape_cast %33 : vector<1x2x32xf32> to vector<2x32xf32>
    %35 = vector.shape_cast %31 : vector<2x32xf32> to vector<1x2x32xf32>
    tpu.vector_store %arg7[%c0_18, %c0_19, %c0_20], %35 {strides = array<i32>} : memref<1x2x32xf32, #tpu.memory_space<vmem>>, vector<1x2x32xf32>,
    return
  }
  func.func @transform_0(%arg0: i32) -> (i32, i32) {
    %c0_i32 = arith.constant 0 : i32
    %c0_i32_0 = arith.constant 0 : i32
    return %arg0, %c0_i32 : i32, i32
  }
  func.func @transform_1(%arg0: i32) -> (i32, i32) {
    %c0_i32 = arith.constant 0 : i32
    %c0_i32_0 = arith.constant 0 : i32
    %c0_i32_1 = arith.constant 0 : i32
    return %c0_i32, %c0_i32_0 : i32, i32
  }
  func.func @transform_2(%arg0: i32) -> (i32, i32) {
    %c0_i32 = arith.constant 0 : i32
    %c0_i32_0 = arith.constant 0 : i32
    %c0_i32_1 = arith.constant 0 : i32
    return %c0_i32, %c0_i32_0 : i32, i32
  }
  func.func @transform_3(%arg0: i32) -> (i32, i32) {
    %c0_i32 = arith.constant 0 : i32
    %c0_i32_0 = arith.constant 0 : i32
    %c0_i32_1 = arith.constant 0 : i32
    return %c0_i32, %c0_i32_0 : i32, i32
  }
  func.func @transform_4(%arg0: i32) -> (i32, i32) {
    %c0_i32 = arith.constant 0 : i32
    %c0_i32_0 = arith.constant 0 : i32
    %c0_i32_1 = arith.constant 0 : i32
    return %c0_i32, %c0_i32_0 : i32, i32
  }
  func.func @transform_5(%arg0: i32) -> (i32, i32) {
    %c0_i32 = arith.constant 0 : i32
    %c0_i32_0 = arith.constant 0 : i32
    return %arg0, %c0_i32 : i32, i32
  }
  func.func @transform_6(%arg0: i32) -> (i32, i32, i32) {
    %c0_i32 = arith.constant 0 : i32
    %c0_i32_0 = arith.constant 0 : i32
    %c0_i32_1 = arith.constant 0 : i32
    return %arg0, %c0_i32, %c0_i32_0 : i32, i32, i32
  }
}

</mosaic_0001>

<llo_original>
// kernel: tpu_custom_call.1
$region0: #{tpu_custom_call.1}
  #allocation0 [shape = 'u32[]', space=smem, size = 0x4, offset = 0x4, fixed_abs, tag = 'smem constant byte address 0x4 - core index']
  #allocation1 [shape = 'u32[144,128]{1,0:T(1,128)}', space=vmem, size = 0x12000, scoped, tag = 'internal scratch']
  %s0 = inlined_call_operand.vmem [shape: f32[16,4], index: 0, kind: input, shape index: {}]
  %s1 = inlined_call_operand.vmem [shape: f32[4,32], index: 1, kind: input, shape index: {}]
  %s2 = inlined_call_operand.vmem [shape: f32[1,32], index: 2, kind: input, shape index: {}]
  %s3 = inlined_call_operand.vmem [shape: f32[1,32], index: 3, kind: input, shape index: {}]
  %s4 = inlined_call_operand.vmem [shape: f32[1,32], index: 4, kind: input, shape index: {}]
  %s5 = inlined_call_operand.hbm [shape: f32[16,32], index: 5, kind: output, shape index: {0}]
  %s6 = inlined_call_operand.hbm [shape: f32[1,2,32], index: 6, kind: output, shape index: {1}]
  %7 = xla_tuple %s5, %s6
  %s8 = sld [smem:[#allocation0]]
  $region38: #{tpu_custom_call.1} parent=0
    _
  %s10 = ssub.s32 1, %s8
  %s11 = scalar_select 0, %s10, %s8
  $region1: #{tpu_custom_call.1} parent=0
    #allocation2 [shape = 'u8[8192]{0}', space=vmem, size = 0x2000, scoped, tag = 'output window, operand 0, single buffered']
    #allocation3 [shape = 's32[1]{0}', space=sflag, size = 0x4, scoped, tag = 'scoped memory for tpu_custom_call.1']
    #allocation4 [shape = 'u8[1024]{0}', space=vmem, size = 0x400, scoped, tag = 'output window, operand 1, single buffered']
    #allocation5 [shape = 's32[1]{0}', space=sflag, size = 0x4, scoped, tag = 'scoped memory for tpu_custom_call.1']
    %12 = vsyncpa [#allocation3], 0
    %13 = vsyncpa [#allocation5], 0
    // Predicated region
    $region2: #{tpu_custom_call.1} parent=1 // pred_check
      _
    $region3: #{tpu_custom_call.1} parent=1 // pred_check_branch
      %15 = sbr.rel (0) target = $region5
    $region4: #{tpu_custom_call.1} parent=1 // pred_region
      _
    $region5: #{tpu_custom_call.1} parent=1 // pred_fallthru
      _
    // Predicated region
    $region6: #{tpu_custom_call.1} parent=1 // pred_check
      _
    $region7: #{tpu_custom_call.1} parent=1 // pred_check_branch
      %17 = sbr.rel (0) target = $region9
    $region8: #{tpu_custom_call.1} parent=1 // pred_region
      _
    $region9: #{tpu_custom_call.1} parent=1 // pred_fallthru
      _
    // Predicated region
    $region10: #{tpu_custom_call.1} parent=1 // pred_check
      _
    $region11: #{tpu_custom_call.1} parent=1 // pred_check_branch
      %19 = sbr.rel (0) target = $region13
    $region12: #{tpu_custom_call.1} parent=1 // pred_region
      _
    $region13: #{tpu_custom_call.1} parent=1 // pred_fallthru
      _
    // Predicated region
    $region14: #{tpu_custom_call.1} parent=1 // pred_check
      _
    $region15: #{tpu_custom_call.1} parent=1 // pred_check_branch
      %21 = sbr.rel (0) target = $region17
    $region16: #{tpu_custom_call.1} parent=1 // pred_region
      _
    $region17: #{tpu_custom_call.1} parent=1 // pred_fallthru
      _
    // Predicated region
    $region18: #{tpu_custom_call.1} parent=1 // pred_check
      _
    $region19: #{tpu_custom_call.1} parent=1 // pred_check_branch
      %23 = sbr.rel (0) target = $region21
    $region20: #{tpu_custom_call.1} parent=1 // pred_region
      _
    $region21: #{tpu_custom_call.1} parent=1 // pred_fallthru
      _
    %v24 = vld [vmem:[%s0] sm:$0xff]
    %v25 = vld [vmem:[%s0 + $0x8] sm:$0xff]
    %v26 = vld [vmem:[%s1] sm:$0xf]
    %v27 = vld [vmem:[%s2] sm:$0x1]
    %v29 = vlaneseq
    %v30 = vshrl.u32 %v29, 7
    %v31 = vsub.s32 0, %v30
    %v32 = vrot.slane %v27, %v31
    %vm34 = vcmask 31744
    %v36 = vsel %vm34, %v24, 0
    %v39 = vsel %vm34, %v25, 0
    %vm41 = vcmask 1043456
    %v43 = vsel %vm41, %v26, 0
    %45 = vmatprep.subr.mxu0 0.0
    %46 = vmatpush1.msra.mxu0 %v43
    %47 = vmatprep.subr.mxu0 0.0
    %48 = vmatpush1.msra.mxu0 0.0
    %49 = vmatprep.subr.mxu0 0.0
    %50 = vmatpush1.msra.mxu0 0.0
    %51 = vmatprep.subr.mxu0 0.0
    %52 = vmatpush1.msra.mxu0 0.0
    %53 = vmatprep.subr.mxu0 0.0
    %54 = vmatpush1.msra.mxu0 0.0
    %55 = vmatprep.subr.mxu0 0.0
    %56 = vmatpush1.msra.mxu0 0.0
    %57 = vmatprep.subr.mxu0 0.0
    %58 = vmatpush1.msra.mxu0 0.0
    %59 = vmatprep.subr.mxu0 0.0
    %60 = vmatpush1.msra.mxu0 0.0
    %61 = vmatprep.subr.mxu0 0.0
    %62 = vmatpush1.msra.mxu0 0.0
    %63 = vmatprep.subr.mxu0 0.0
    %64 = vmatpush1.msra.mxu0 0.0
    %65 = vmatprep.subr.mxu0 0.0
    %66 = vmatpush1.msra.mxu0 0.0
    %67 = vmatprep.subr.mxu0 0.0
    %68 = vmatpush1.msra.mxu0 0.0
    %69 = vmatprep.subr.mxu0 0.0
    %70 = vmatpush1.msra.mxu0 0.0
    %71 = vmatprep.subr.mxu0 0.0
    %72 = vmatpush1.msra.mxu0 0.0
    %73 = vmatprep.subr.mxu0 0.0
    %74 = vmatpush1.msra.mxu0 0.0
    %75 = vmatprep.subr.mxu0 0.0
    %76 = vmatpush1.msra.mxu0 0.0
    %77 = vmatprep.subr.mxu0 0.0
    %78 = vmatpush1.msra.mxu0 0.0
    %79 = vmatprep.subr.mxu0 0.0
    %80 = vmatpush1.msra.mxu0 0.0
    %81 = vmatprep.subr.mxu0 0.0
    %82 = vmatpush1.msra.mxu0 0.0
    %83 = vmatprep.subr.mxu0 0.0
    %84 = vmatpush1.msra.mxu0 0.0
    %85 = vmatprep.subr.mxu0 0.0
    %86 = vmatpush1.msra.mxu0 0.0
    %87 = vmatprep.subr.mxu0 0.0
    %88 = vmatpush1.msra.mxu0 0.0
    %89 = vmatprep.subr.mxu0 0.0
    %90 = vmatpush1.msra.mxu0 0.0
    %91 = vmatprep.subr.mxu0 0.0
    %92 = vmatpush1.msra.mxu0 0.0
    %93 = vmatprep.subr.mxu0 0.0
    %94 = vmatpush1.msra.mxu0 0.0
    %95 = vmatprep.subr.mxu0 0.0
    %96 = vmatpush1.msra.mxu0 0.0
    %97 = vmatprep.subr.mxu0 0.0
    %98 = vmatpush1.msra.mxu0 0.0
    %99 = vmatprep.subr.mxu0 0.0
    %100 = vmatpush1.msra.mxu0 0.0
    %101 = vmatprep.subr.mxu0 0.0
    %102 = vmatpush1.msra.mxu0 0.0
    %103 = vmatprep.subr.mxu0 0.0
    %104 = vmatpush1.msra.mxu0 0.0
    %105 = vmatprep.subr.mxu0 0.0
    %106 = vmatpush1.msra.mxu0 0.0
    %107 = vmatprep.subr.mxu0 0.0
    %108 = vmatpush1.msra.mxu0 0.0
    %109 = vmatprep.mubr.f32.mxu0 0.0
    %110 = vmatmul.mubr.f32.gmra.mrb[0].mxu0 %v36
    %v111 = vpop.f32.mrb[0].mxu0
    %v112 = vadd.f32 %v32, %v111
    %v113 = vpop.f32.mrb[0].mxu0
    %114 = vmatprep.mubr.f32.mxu0 0.0
    %115 = vmatmul.mubr.f32.gmra.mrb[0].mxu0 %v39
    %v116 = vpop.f32.mrb[0].mxu0
    %v117 = vadd.f32 %v32, %v116
    %v118 = vpop.f32.mrb[0].mxu0
    %119 = vdwg.mxu0
    %vm120 = vcmask 261120
    %v121 = vsel %vm120, %v112, 0.0
    %122 = vadd.xlane.f32.xlu0 %v121
    %v123 = vpop.xlane.xlu0 %122
    %v124 = vsel %vm120, %v117, 0.0
    %125 = vadd.xlane.f32.xlu0 %v124
    %v126 = vpop.xlane.xlu0 %125
    %v127 = vmul.f32 %v123, 0.03125
    %v128 = vmul.f32 %v126, 0.03125
    %v129 = vsub.f32 %v112, %v127
    %v130 = vsub.f32 %v117, %v128
    %v131 = vmul.f32 %v129, %v129
    %v132 = vmul.f32 %v130, %v130
    %v133 = vsel %vm120, %v131, 0.0
    %134 = vadd.xlane.f32.xlu0 %v133
    %v135 = vpop.xlane.xlu0 %134
    %v136 = vsel %vm120, %v132, 0.0
    %137 = vadd.xlane.f32.xlu0 %v136
    %v138 = vpop.xlane.xlu0 %137
    %v139 = vmul.f32 %v135, 0.03125
    %v140 = vmul.f32 %v138, 0.03125
    %v141 = vadd.f32 %v139, 1e-05
    %v142 = vadd.f32 %v140, 1e-05
    %v143 = vrsqrt.pop %v141
    %v144 = vrsqrt.pop %v142
    %v145 = vmul.f32 %v129, %v143
    %v146 = vmul.f32 %v130, %v144
    %v147 = vld [vmem:[%s3] sm:$0x1]
    %v149 = vlaneseq
    %v150 = vshrl.u32 %v149, 7
    %v151 = vsub.s32 0, %v150
    %v152 = vrot.slane %v147, %v151
    %v154 = vmul.f32 %v145, %v152
    %v155 = vmul.f32 %v146, %v152
    %v156 = vld [vmem:[%s4] sm:$0x1]
    %v158 = vlaneseq
    %v159 = vshrl.u32 %v158, 7
    %v160 = vsub.s32 0, %v159
    %v161 = vrot.slane %v156, %v160
    %v163 = vadd.f32 %v154, %v161
    %v164 = vadd.f32 %v155, %v161
    %v165 = vmax.f32 %v163, 0.0
    %v166 = vmax.f32 %v164, 0.0
    %v167 = vsel %vm120, %v165, -inf
    %v168 = vrot.slane %v167, 4
    %v169 = vmax.f32 %v167, %v168
    %v170 = vrot.slane %v169, 2
    %v171 = vmax.f32 %v169, %v170
    %v172 = vrot.slane %v171, 1
    %v173 = vmax.f32 %v171, %v172
    %v174 = vsel %vm120, %v166, -inf
    %v175 = vrot.slane %v174, 4
    %v176 = vmax.f32 %v174, %v175
    %v177 = vrot.slane %v176, 2
    %v178 = vmax.f32 %v176, %v177
    %v179 = vrot.slane %v178, 1
    %v180 = vmax.f32 %v178, %v179
    %181 = vst.msk [vmem:[#allocation2] sm:$0xff] %vm120, %v165
    %182 = vst.msk [vmem:[#allocation2 + $0x8] sm:$0xff] %vm120, %v166
    %vm185 = vcmask 1041409
    %v186 = vsel %vm185, %v180, %v173
    %vm188 = vcmask 254976
    %189 = vst.msk [vmem:[#allocation4] sm:$0x3] %vm188, %v186
    // Predicated region
    $region22: #{tpu_custom_call.1} parent=1 // pred_check
      _
    $region23: #{tpu_custom_call.1} parent=1 // pred_check_branch
      %191 = sbr.rel (0) target = $region25
    $region24: #{tpu_custom_call.1} parent=1 // pred_region
      %s193 = ssub.s32 256, 256
      %194 = vsyncadd [#allocation3], %s193
      %s195 = sshll.u32 [#allocation2], 4
      %s196 = int_to_ptr.vmem [resolvable:$true] %s195
      %201 = dma.vmem_to_hbm [thread:$0]  %s196, 256, %s5, [#allocation3], 128, 128, 8
    $region25: #{tpu_custom_call.1} parent=1 // pred_fallthru
      _
    // Predicated region
    $region26: #{tpu_custom_call.1} parent=1 // pred_check
      _
    $region27: #{tpu_custom_call.1} parent=1 // pred_check_branch
      %203 = sbr.rel (0) target = $region29
    $region28: #{tpu_custom_call.1} parent=1 // pred_region
      %s205 = ssub.s32 32, 32
      %206 = vsyncadd [#allocation5], %s205
      %s208 = sshll.u32 [#allocation4], 4
      %s209 = int_to_ptr.vmem [resolvable:$true] %s208
      %211 = dma.vmem_to_hbm [thread:$0]  %s209, 32, %s6, [#allocation5]
    $region29: #{tpu_custom_call.1} parent=1 // pred_fallthru
      _
    // Predicated region
    $region30: #{tpu_custom_call.1} parent=1 // pred_check
      _
    $region31: #{tpu_custom_call.1} parent=1 // pred_check_branch
      %213 = sbr.rel (0) target = $region33
    $region32: #{tpu_custom_call.1} parent=1 // pred_region
      %214 = dma.done [#allocation3], 256
    $region33: #{tpu_custom_call.1} parent=1 // pred_fallthru
      _
    // Predicated region
    $region34: #{tpu_custom_call.1} parent=1 // pred_check
      _
    $region35: #{tpu_custom_call.1} parent=1 // pred_check_branch
      %216 = sbr.rel (0) target = $region37
    $region36: #{tpu_custom_call.1} parent=1 // pred_region
      %217 = dma.done [#allocation5], 32
    $region37: #{tpu_custom_call.1} parent=1 // pred_fallthru
      _
    %218 = vsyncpa [#allocation3], 1
    %219 = vsyncpa [#allocation5], 1

</llo_original>
